<compile_context>
chip_gen: v7x
topology: tpu7x:2x2x1
jax: 0.10.0
libtpu: 0.0.40
codegen_flags: <defaults>
</compile_context>

<pallas_src>
import jax
import jax.numpy as jnp
from jax.experimental import pallas as pl
from jax.experimental.pallas import tpu as pltpu


def linear_sum_kernel(x_ref, wb_ref, o_ref):
    """loss = sum(x @ W + b), with W and b packed into wb = [W; b]."""
    d_in = wb_ref.shape[0] - 1          # static
    batch = x_ref.shape[0]              # static

    x = x_ref[...]                      # (B, D_in)
    w = wb_ref[0:d_in, :]               # (D_in, D_out)
    b = wb_ref[d_in:d_in + 1, :]        # (1, D_out)

    act1 = jnp.dot(x, w, preferred_element_type=jnp.float32)   # (B, D_out)
    # sum(act1 + b) == sum(act1) + B * sum(b): avoids the (B, D) bias broadcast.
    o_ref[0, 0] = jnp.sum(act1) + batch * jnp.sum(b)


def model_forward(x, w1, b1, output_type="dict"):
    """x: (B, D) f32; w1: (D, D) stored [in, out]; b1: (1, D).

    Returns {'loss': scalar} for output_type='dict', else the scalar
    (mirrors ModelContainerVariableOutputType's output_type dispatch, which is
    host-level Python control flow, not kernel work).
    """
    # Pack weight + bias into one slab -> a single params DMA.  Weights are
    # call-invariant, so in a real pipeline this concat happens once, outside
    # the hot path.
    wb = jnp.concatenate([w1, b1], axis=0)          # (D + 1, D)

    out = pl.pallas_call(
        linear_sum_kernel,
        out_shape=jax.ShapeDtypeStruct((1, 1), jnp.float32),
        in_specs=[
            pl.BlockSpec(memory_space=pltpu.MemorySpace.VMEM),   # x
            pl.BlockSpec(memory_space=pltpu.MemorySpace.VMEM),   # [W; b]
        ],
        out_specs=pl.BlockSpec(memory_space=pltpu.MemorySpace.SMEM),
    )(x, wb)

    loss = out[0, 0]
    if output_type == "dict":
        return {"loss": loss}
    return loss                                      # output_type is torch.tensor


def _init_linear_params(key, in_dim, out_dim):
    """Deterministic torch.nn.Linear-style init (uniform +/- 1/sqrt(in))."""
    kw, kb = jax.random.split(key)
    bound = 1.0 / (in_dim ** 0.5)
    # Stored as [in, out] so the kernel computes x @ W.
    w = jax.random.uniform(kw, (in_dim, out_dim), jnp.float32, -bound, bound)
    b = jax.random.uniform(kb, (1, out_dim), jnp.float32, -bound, bound)
    return w, b


if __name__ == "__main__":
    dim = 16
    batch = 8

    key = jax.random.PRNGKey(0)
    kx, k1 = jax.random.split(key, 2)

    x = jax.random.normal(kx, (batch, dim), jnp.float32)
    w1, b1 = _init_linear_params(k1, dim, dim)       # self.linear1

    # Default output_type=dict path.
    result = model_forward(x, w1, b1, output_type="dict")
    loss = result["loss"]
    jax.block_until_ready(loss)

    # Pure-JAX reference of the forward semantics: sum(linear1(x)).
    ref = jnp.sum(x @ w1 + b1)
    assert jnp.allclose(loss, ref, rtol=1e-5, atol=1e-4), (loss, ref)

    # output_type=torch.tensor path returns the bare scalar.
    loss_t = model_forward(x, w1, b1, output_type="tensor")
    jax.block_until_ready(loss_t)
    assert jnp.allclose(loss_t, ref, rtol=1e-5, atol=1e-4), (loss_t, ref)

    print("KERNEL_OK")
</pallas_src>

<mosaic_0001>
module attributes {stable_mosaic.version = 11 : i64} {
  func.func @linear_sum_kernel(%arg0: memref<8x16xf32, #tpu.memory_space<vmem>>, %arg1: memref<17x16xf32, #tpu.memory_space<vmem>>, %arg2: memref<1x1xf32, #tpu.memory_space<smem>>) attributes {dimension_semantics = [], scalar_prefetch = 0 : i64, scratch_operands = 0 : i64, tpu.core_type = #tpu.core_type<tc>} {
    %c0 = arith.constant 0 : index
    %c0_0 = arith.constant 0 : index
    %0 = vector.load %arg0[%c0, %c0_0] : memref<8x16xf32, #tpu.memory_space<vmem>>, vector<8x16xf32>
    %c0_1 = arith.constant 0 : index
    %c0_2 = arith.constant 0 : index
    %1 = vector.load %arg1[%c0_1, %c0_2] : memref<17x16xf32, #tpu.memory_space<vmem>>, vector<16x16xf32>
    %c16 = arith.constant 16 : index
    %c0_3 = arith.constant 0 : index
    %2 = vector.load %arg1[%c16, %c0_3] : memref<17x16xf32, #tpu.memory_space<vmem>>, vector<1x16xf32>
    %cst = arith.constant dense<0.000000e+00> : vector<8x16xf32>
    %3 = tpu.matmul %0, %1, %cst {dimension_numbers = #tpu.dot_dimension_numbers<[1], [0], [0], [1], [0, 0, 1, 1], [], []>} : vector<8x16xf32>, vector<16x16xf32>, vector<8x16xf32> -> vector<8x16xf32>
    %4 = vector.shape_cast %3 : vector<8x16xf32> to vector<1x8x16xf32>
    %cst_4 = arith.constant dense<0.000000e+00> : vector<1xf32>
    %5 = vector.multi_reduction <add>, %4, %cst_4 [1, 2] : vector<1x8x16xf32> to vector<1xf32>
    %6 = vector.shape_cast %5 : vector<1xf32> to vector<1x1x1xf32>
    %7 = vector.extract %6[0, 0, 0] : f32 from vector<1x1x1xf32>
    %8 = vector.shape_cast %2 : vector<1x16xf32> to vector<1x1x16xf32>
    %cst_5 = arith.constant dense<0.000000e+00> : vector<1xf32>
    %9 = vector.multi_reduction <add>, %8, %cst_5 [1, 2] : vector<1x1x16xf32> to vector<1xf32>
    %10 = vector.shape_cast %9 : vector<1xf32> to vector<1x1x1xf32>
    %11 = vector.extract %10[0, 0, 0] : f32 from vector<1x1x1xf32>
    %cst_6 = arith.constant 8.000000e+00 : f32
    %12 = arith.mulf %cst_6, %11 : f32
    %13 = arith.addf %7, %12 : f32
    %c0_7 = arith.constant 0 : index
    %c0_8 = arith.constant 0 : index
    %14 = memref.load %arg2[%c0_7, %c0_8] : memref<1x1xf32, #tpu.memory_space<smem>>
    memref.store %13, %arg2[%c0_7, %c0_8] : memref<1x1xf32, #tpu.memory_space<smem>>
    return
  }
}

</mosaic_0001>

<llo_original>
// kernel: tpu_custom_call.1
$region0: #{tpu_custom_call.1}
  #allocation0 [shape = 'u32[]', space=smem, size = 0x4, offset = 0x4, fixed_abs, tag = 'smem constant byte address 0x4 - core index']
  #allocation1 [shape = 'u32[144,128]{1,0:T(1,128)}', space=vmem, size = 0x12000, scoped, tag = 'internal scratch']
  %s0 = inlined_call_operand.vmem [shape: f32[8,16], index: 0, kind: input, shape index: {}]
  %s1 = inlined_call_operand.vmem [shape: f32[17,16], index: 1, kind: input, shape index: {}]
  %s2 = inlined_call_operand.hbm [shape: f32[1,1], index: 2, kind: output, shape index: {}]
  %s3 = sld [smem:[#allocation0]]
  $region18: #{tpu_custom_call.1} parent=0
    _
  %s5 = ssub.s32 1, %s3
  %s6 = scalar_select 0, %s5, %s3
  $region1: #{tpu_custom_call.1} parent=0
    #allocation2 [shape = 'u8[512]{0}', space=smem, size = 0x200, scoped, tag = 'output window, operand 0, single buffered']
    #allocation3 [shape = 's32[1]{0}', space=sflag, size = 0x4, scoped, tag = 'scoped memory for tpu_custom_call.1']
    %7 = vsyncpa [#allocation3], 0
    // Predicated region
    $region2: #{tpu_custom_call.1} parent=1 // pred_check
      _
    $region3: #{tpu_custom_call.1} parent=1 // pred_check_branch
      %9 = sbr.rel (0) target = $region5
    $region4: #{tpu_custom_call.1} parent=1 // pred_region
      _
    $region5: #{tpu_custom_call.1} parent=1 // pred_fallthru
      _
    // Predicated region
    $region6: #{tpu_custom_call.1} parent=1 // pred_check
      _
    $region7: #{tpu_custom_call.1} parent=1 // pred_check_branch
      %11 = sbr.rel (0) target = $region9
    $region8: #{tpu_custom_call.1} parent=1 // pred_region
      _
    $region9: #{tpu_custom_call.1} parent=1 // pred_fallthru
      _
    %v12 = vld [vmem:[%s0] sm:$0xff]
    %v13 = vld [vmem:[%s1] sm:$0xff]
    %v14 = vld [vmem:[%s1 + $0x8] sm:$0xff]
    %v15 = vld [vmem:[%s1 + $0x10] sm:$0x1]
    %vm16 = vcmask 130048
    %v18 = vsel %vm16, %v12, 0
    %20 = vmatprep.subr.mxu0 0.0
    %21 = vmatpush1.msra.mxu0 %v13
    %22 = vmatprep.subr.mxu0 0.0
    %23 = vmatpush1.msra.mxu0 %v14
    %24 = vmatprep.subr.mxu0 0.0
    %25 = vmatpush1.msra.mxu0 0.0
    %26 = vmatprep.subr.mxu0 0.0
    %27 = vmatpush1.msra.mxu0 0.0
    %28 = vmatprep.subr.mxu0 0.0
    %29 = vmatpush1.msra.mxu0 0.0
    %30 = vmatprep.subr.mxu0 0.0
    %31 = vmatpush1.msra.mxu0 0.0
    %32 = vmatprep.subr.mxu0 0.0
    %33 = vmatpush1.msra.mxu0 0.0
    %34 = vmatprep.subr.mxu0 0.0
    %35 = vmatpush1.msra.mxu0 0.0
    %36 = vmatprep.subr.mxu0 0.0
    %37 = vmatpush1.msra.mxu0 0.0
    %38 = vmatprep.subr.mxu0 0.0
    %39 = vmatpush1.msra.mxu0 0.0
    %40 = vmatprep.subr.mxu0 0.0
    %41 = vmatpush1.msra.mxu0 0.0
    %42 = vmatprep.subr.mxu0 0.0
    %43 = vmatpush1.msra.mxu0 0.0
    %44 = vmatprep.subr.mxu0 0.0
    %45 = vmatpush1.msra.mxu0 0.0
    %46 = vmatprep.subr.mxu0 0.0
    %47 = vmatpush1.msra.mxu0 0.0
    %48 = vmatprep.subr.mxu0 0.0
    %49 = vmatpush1.msra.mxu0 0.0
    %50 = vmatprep.subr.mxu0 0.0
    %51 = vmatpush1.msra.mxu0 0.0
    %52 = vmatprep.subr.mxu0 0.0
    %53 = vmatpush1.msra.mxu0 0.0
    %54 = vmatprep.subr.mxu0 0.0
    %55 = vmatpush1.msra.mxu0 0.0
    %56 = vmatprep.subr.mxu0 0.0
    %57 = vmatpush1.msra.mxu0 0.0
    %58 = vmatprep.subr.mxu0 0.0
    %59 = vmatpush1.msra.mxu0 0.0
    %60 = vmatprep.subr.mxu0 0.0
    %61 = vmatpush1.msra.mxu0 0.0
    %62 = vmatprep.subr.mxu0 0.0
    %63 = vmatpush1.msra.mxu0 0.0
    %64 = vmatprep.subr.mxu0 0.0
    %65 = vmatpush1.msra.mxu0 0.0
    %66 = vmatprep.subr.mxu0 0.0
    %67 = vmatpush1.msra.mxu0 0.0
    %68 = vmatprep.subr.mxu0 0.0
    %69 = vmatpush1.msra.mxu0 0.0
    %70 = vmatprep.subr.mxu0 0.0
    %71 = vmatpush1.msra.mxu0 0.0
    %72 = vmatprep.subr.mxu0 0.0
    %73 = vmatpush1.msra.mxu0 0.0
    %74 = vmatprep.subr.mxu0 0.0
    %75 = vmatpush1.msra.mxu0 0.0
    %76 = vmatprep.subr.mxu0 0.0
    %77 = vmatpush1.msra.mxu0 0.0
    %78 = vmatprep.subr.mxu0 0.0
    %79 = vmatpush1.msra.mxu0 0.0
    %80 = vmatprep.subr.mxu0 0.0
    %81 = vmatpush1.msra.mxu0 0.0
    %82 = vmatprep.subr.mxu0 0.0
    %83 = vmatpush1.msra.mxu0 0.0
    %84 = vmatprep.mubr.f32.mxu0 0.0
    %85 = vmatmul.mubr.f32.gmra.mrb[0].mxu0 %v18
    %v86 = vpop.f32.mrb[0].mxu0
    %v87 = vadd.f32 0.0, %v86
    %v88 = vpop.f32.mrb[0].mxu0
    %89 = vdwg.mxu0
    %v90 = vsel %vm16, %v87, 0.0
    %91 = vadd.xlane.f32.xlu0 %v90
    %v92 = vpop.xlane.xlu0 %91
    %v93 = vrot.slane %v92, 4
    %v94 = vadd.f32 %v92, %v93
    %v95 = vrot.slane %v94, 2
    %v96 = vadd.f32 %v94, %v95
    %v97 = vrot.slane %v96, 1
    %v98 = vadd.f32 %v96, %v97
    %s99 = vtos %v98
    %vm100 = vcmask 122880
    %v101 = vsel %vm100, %v15, 0.0
    %102 = vadd.xlane.f32.xlu0 %v101
    %v103 = vpop.xlane.xlu0 %102
    %v104 = vrot.slane %v103, 4
    %v105 = vadd.f32 %v103, %v104
    %v106 = vrot.slane %v105, 2
    %v107 = vadd.f32 %v105, %v106
    %v108 = vrot.slane %v107, 1
    %v109 = vadd.f32 %v107, %v108
    %s110 = vtos %v109
    %s111 = smul.f32 %s110, 8.0
    %s112 = sadd.f32 %s99, %s111
    %s113 = scalar_lea.smem [#allocation2], 0
    %114 = sst [smem:[%s113]] %s112
    // Predicated region
    $region10: #{tpu_custom_call.1} parent=1 // pred_check
      _
    $region11: #{tpu_custom_call.1} parent=1 // pred_check_branch
      %116 = sbr.rel (0) target = $region13
    $region12: #{tpu_custom_call.1} parent=1 // pred_region
      %s118 = ssub.s32 16, 16
      %119 = vsyncadd [#allocation3], %s118
      %122 = dma.smem_to_hbm [#allocation2], 16, %s2, [#allocation3]
    $region13: #{tpu_custom_call.1} parent=1 // pred_fallthru
      _
    // Predicated region
    $region14: #{tpu_custom_call.1} parent=1 // pred_check
      _
    $region15: #{tpu_custom_call.1} parent=1 // pred_check_branch
      %124 = sbr.rel (0) target = $region17
    $region16: #{tpu_custom_call.1} parent=1 // pred_region
      %125 = dma.done [#allocation3], 16
    $region17: #{tpu_custom_call.1} parent=1 // pred_fallthru
      _
    %126 = sfence
    %127 = vsyncpa [#allocation3], 1

</llo_original>
